<compile_context>
chip_gen: v5e
topology: v5e:2x2
jax: 0.10.0
libtpu: 0.0.40
codegen_flags: <defaults>
</compile_context>

<pallas_src>
import functools

import jax
import jax.numpy as jnp
from jax.experimental import pallas as pl
from jax.experimental.pallas import tpu as pltpu

LANES = 128
SUBLANES = 8
TM_MAX = 2048  # rows per block -> 2048*128*4B = 1 MiB per f32 block


def _quantizer_kernel(scale_ref, x_ref, o_ref, *, qmax: float, dequantize: bool):
    # scale_ref: (1,) f32 scalar-prefetch (SMEM); x_ref/o_ref: (TM, 128) VMEM
    scale = scale_ref[0]
    x = x_ref[...].astype(jnp.float32)
    # TODO(synk): no guard against scale == 0 (matches reference behavior).
    q = jnp.clip(jnp.round(x / scale), 0.0, qmax)
    y = q * scale if dequantize else q
    o_ref[...] = y.astype(o_ref.dtype)


def quantizer_forward(x: jnp.ndarray,
                      scale: jnp.ndarray,
                      precision: int = 8,
                      dequantize: bool = True) -> jnp.ndarray:
    """Fake-quantize `x` (any shape) with a per-tensor scale."""
    orig_shape = x.shape
    orig_dtype = x.dtype

    n = x.size
    # Pad only to a multiple of 128 lanes (not 8*128); partial row-blocks are
    # handled by Pallas' masked edge blocks, and the tail is sliced off below.
    n_pad = ((n + LANES - 1) // LANES) * LANES
    flat = jnp.ravel(x)
    if n_pad != n:
        flat = jnp.pad(flat, (0, n_pad - n))
    rows = n_pad // LANES
    x2d = flat.reshape(rows, LANES)

    # Block rows: multiple of 8, capped at TM_MAX, clamped for small inputs.
    rows8 = ((rows + SUBLANES - 1) // SUBLANES) * SUBLANES
    tm = min(TM_MAX, rows8)
    num_blocks = pl.cdiv(rows, tm)

    scale_arr = jnp.asarray(scale, dtype=jnp.float32).reshape((1,))
    qmax = float(2 ** precision - 1)

    kernel = functools.partial(_quantizer_kernel, qmax=qmax, dequantize=dequantize)

    grid_spec = pltpu.PrefetchScalarGridSpec(
        num_scalar_prefetch=1,            # scale lands in SMEM before the grid
        grid=(num_blocks,),
        in_specs=[pl.BlockSpec((tm, LANES), lambda i, scale_ref: (i, 0))],
        out_specs=pl.BlockSpec((tm, LANES), lambda i, scale_ref: (i, 0)),
    )

    out2d = pl.pallas_call(
        kernel,
        out_shape=jax.ShapeDtypeStruct((rows, LANES), orig_dtype),
        grid_spec=grid_spec,
        compiler_params=pltpu.CompilerParams(
            dimension_semantics=("parallel",),      # megacore sharding on v7x
            vmem_limit_bytes=32 * 1024 * 1024,      # safe on v5e/v6e/v7x
        ),
    )(scale_arr, x2d)

    out = out2d.reshape(-1)[:n].reshape(orig_shape)
    return out  # already in the original dtype (cast happened in-kernel)


def _reference(x, scale, precision, dequantize):
    qmax = float(2 ** precision - 1)
    xf = x.astype(jnp.float32)
    q = jnp.clip(jnp.round(xf / scale), 0.0, qmax)
    y = q * scale if dequantize else q
    return y.astype(x.dtype)


if __name__ == "__main__":
    key = jax.random.PRNGKey(0)
    # Small NCHW activation tensor, consistent with a conv-activation quantizer.
    x = jax.random.normal(key, (2, 4, 16, 16), dtype=jnp.float32) * 2.0

    # Deterministic quantizer parameters (would be learned in PLiNIO).
    precision = 8
    dequantize = True
    scale = jnp.float32(0.05)   # per-tensor scale factor

    y = quantizer_forward(x, scale, precision=precision, dequantize=dequantize)
    y = jax.block_until_ready(y)

    y_ref = _reference(x, scale, precision, dequantize)
    assert y.shape == x.shape and y.dtype == x.dtype
    assert jnp.allclose(y, y_ref, atol=1e-6), "mismatch vs reference"

    print("KERNEL_OK")
</pallas_src>

<mosaic_0001>
module attributes {stable_mosaic.version = 11 : i64} {
  func.func @_quantizer_kernel(%arg0: i32, %arg1: memref<1xf32, #tpu.memory_space<smem>>, %arg2: memref<16x128xf32, #tpu.memory_space<vmem>>, %arg3: memref<16x128xf32, #tpu.memory_space<vmem>>) attributes {dimension_semantics = [#tpu.dimension_semantics<parallel>], iteration_bounds = array<i64: 1>, scalar_prefetch = 1 : i64, scratch_operands = 0 : i64, tpu.core_type = #tpu.core_type<tc>, window_params = [{transform_indices = @transform_0, window_bounds = array<i64: 16, 128>}, {transform_indices = @transform_1, window_bounds = array<i64: 16, 128>}]} {
    %c0 = arith.constant 0 : index
    %0 = memref.load %arg1[%c0] : memref<1xf32, #tpu.memory_space<smem>>
    %c0_0 = arith.constant 0 : index
    %c0_1 = arith.constant 0 : index
    %1 = vector.load %arg2[%c0_0, %c0_1] : memref<16x128xf32, #tpu.memory_space<vmem>>, vector<16x128xf32>
    %2 = vector.broadcast %0 : f32 to vector<16x128xf32>
    %3 = arith.divf %1, %2 : vector<16x128xf32>
    %4 = math.roundeven %3 : vector<16x128xf32>
    %cst = arith.constant 0.000000e+00 : f32
    %cst_2 = arith.constant 2.550000e+02 : f32
    %5 = vector.broadcast %cst : f32 to vector<16x128xf32>
    %6 = arith.maximumf %5, %4 : vector<16x128xf32>
    %7 = vector.broadcast %cst_2 : f32 to vector<16x128xf32>
    %8 = arith.minimumf %7, %6 : vector<16x128xf32>
    %9 = vector.broadcast %0 : f32 to vector<16x128xf32>
    %10 = arith.mulf %8, %9 : vector<16x128xf32>
    %c0_3 = arith.constant 0 : index
    %c0_4 = arith.constant 0 : index
    %11 = vector.load %arg3[%c0_3, %c0_4] : memref<16x128xf32, #tpu.memory_space<vmem>>, vector<16x128xf32>
    tpu.vector_store %arg3[%c0_3, %c0_4], %10 {strides = array<i32>} : memref<16x128xf32, #tpu.memory_space<vmem>>, vector<16x128xf32>,
    return
  }
  func.func @transform_0(%arg0: i32, %arg1: memref<1xf32, #tpu.memory_space<smem>>) -> (i32, i32) {
    %c0_i32 = arith.constant 0 : i32
    %c0_i32_0 = arith.constant 0 : i32
    return %arg0, %c0_i32 : i32, i32
  }
  func.func @transform_1(%arg0: i32, %arg1: memref<1xf32, #tpu.memory_space<smem>>) -> (i32, i32) {
    %c0_i32 = arith.constant 0 : i32
    %c0_i32_0 = arith.constant 0 : i32
    return %arg0, %c0_i32 : i32, i32
  }
}

</mosaic_0001>

<llo_original>
// kernel: tpu_custom_call.1
$region0: #{tpu_custom_call.1}
  #allocation0 [shape = 'u32[]', space=smem, size = 0x4, offset = 0x4, fixed_abs, tag = 'smem constant byte address 0x4 - core index']
  #allocation1 [shape = 'u32[72,128]{1,0:T(1,128)}', space=vmem, size = 0x9000, scoped, tag = 'internal scratch']
  #allocation2 [shape = 's32[1]{0}', space=sflag, size = 0x4, scoped, tag = 'scoped memory for tpu_custom_call.1']
  #allocation3 [shape = 'f32[1]{0:T(128)S(6)}', space=smem, size = 0x200, scoped, tag = 'prefetched SMEM operand 0']
  %s0 = inlined_call_operand.<no memory space> [shape: f32[1], index: 0, kind: input, shape index: {}]
  %s1 = inlined_call_operand.hbm [shape: f32[16,128], index: 1, kind: input, shape index: {}]
  %s2 = inlined_call_operand.hbm [shape: f32[16,128], index: 2, kind: output, shape index: {}]
  %s3 = sld [smem:[#allocation0]]
  $region18: #{tpu_custom_call.1} parent=0
    _
  %s5 = ssub.s32 1, %s3
  %s6 = scalar_select 0, %s5, %s3
  %7 = sst [smem:[#allocation3]] %s0
  $region1: #{tpu_custom_call.1} parent=0
    #allocation4 [shape = 'u8[8192]{0}', space=vmem, size = 0x2000, scoped, tag = 'input window, operand 1, single buffered']
    #allocation5 [shape = 's32[1]{0}', space=sflag, size = 0x4, scoped, tag = 'scoped memory for tpu_custom_call.1']
    #allocation6 [shape = 's32[1]{0}', space=sflag, size = 0x4, scoped, tag = 'scoped memory for tpu_custom_call.1']
    #allocation7 [shape = 'u8[8192]{0}', space=vmem, size = 0x2000, scoped, tag = 'output window, operand 0, single buffered']
    %8 = vsyncpa [#allocation5], 0
    %9 = vsyncpa [#allocation6], 0
    // Predicated region
    $region2: #{tpu_custom_call.1} parent=1 // pred_check
      _
    $region3: #{tpu_custom_call.1} parent=1 // pred_check_branch
      %11 = sbr.rel (0) target = $region5
    $region4: #{tpu_custom_call.1} parent=1 // pred_region
      %13 = vsyncadd [#allocation5], 0
      %s14 = sshll.u32 %s1, 4
      %s15 = int_to_ptr.hbm [resolvable:$true] %s14
      %s16 = sshll.u32 [#allocation4], 4
      %s17 = int_to_ptr.vmem [resolvable:$true] %s16
      %22 = dma.hbm_to_vmem [thread:$0]  %s15, 256, %s17, [#allocation5], 128, 128, 8
    $region5: #{tpu_custom_call.1} parent=1 // pred_fallthru
      _
    // Predicated region
    $region6: #{tpu_custom_call.1} parent=1 // pred_check
      _
    $region7: #{tpu_custom_call.1} parent=1 // pred_check_branch
      %24 = sbr.rel (0) target = $region9
    $region8: #{tpu_custom_call.1} parent=1 // pred_region
      %26 = dma.done [#allocation5], 256
    $region9: #{tpu_custom_call.1} parent=1 // pred_fallthru
      _
    %s27 = sld [smem:[#allocation3]]
    %v28 = vld [vmem:[#allocation4] sm:$0xff]
    %v29 = vld [vmem:[#allocation4 + $0x8] sm:$0xff]
    %v30 = vstv %s27
    %v31 = vrcp.pop %v30
    %v32 = vmul.f32 %v30, %v31
    %v33 = vsub.f32 1.0, %v32
    %v34 = vmul.f32 %v31, %v33
    %v35 = vadd.f32 %v31, %v34
    %vm36 = vweird.f32 %v30
    %vm37 = vweird.f32 %v31
    %vm38 = vmor %vm36, %vm37
    %v39 = vsel %vm38, %v31, %v35
    %v40 = vand.u32 2147483647, %v30
    %vm41 = vcmp.eq.f32.partialorder %v40, 8.507059e+37
    %v42 = vand.u32 %v30, 2147483648
    %v43 = vor.u32 1.1754944e-38, %v42
    %v44 = vsel %vm41, %v43, %v39
    %v45 = vmul.f32 %v28, %v44
    %v46 = vmul.f32 %v29, %v44
    %v47 = vround.ne.pseudo %v45
    %v48 = vround.ne.pseudo %v46
    %v49 = vmax.f32 %v47, 0.0
    %v50 = vmax.f32 %v48, 0.0
    %v51 = vmin.f32 %v49, 255.0
    %v52 = vmin.f32 %v50, 255.0
    %v53 = vmul.f32 %v51, %v30
    %v54 = vmul.f32 %v52, %v30
    %55 = vst [vmem:[#allocation7] sm:$0xff] %v53
    %56 = vst [vmem:[#allocation7 + $0x8] sm:$0xff] %v54
    // Predicated region
    $region10: #{tpu_custom_call.1} parent=1 // pred_check
      _
    $region11: #{tpu_custom_call.1} parent=1 // pred_check_branch
      %58 = sbr.rel (0) target = $region13
    $region12: #{tpu_custom_call.1} parent=1 // pred_region
      %60 = vsyncadd [#allocation6], 0
      %s61 = sshll.u32 [#allocation7], 4
      %s62 = int_to_ptr.vmem [resolvable:$true] %s61
      %s63 = sshll.u32 %s2, 4
      %s64 = int_to_ptr.hbm [resolvable:$true] %s63
      %69 = dma.vmem_to_hbm [thread:$0]  %s62, 256, %s64, [#allocation6], 128, 128, 8
    $region13: #{tpu_custom_call.1} parent=1 // pred_fallthru
      _
    // Predicated region
    $region14: #{tpu_custom_call.1} parent=1 // pred_check
      _
    $region15: #{tpu_custom_call.1} parent=1 // pred_check_branch
      %71 = sbr.rel (0) target = $region17
    $region16: #{tpu_custom_call.1} parent=1 // pred_region
      %73 = dma.done [#allocation6], 256
    $region17: #{tpu_custom_call.1} parent=1 // pred_fallthru
      _
    %74 = vsyncpa [#allocation5], 1
    %75 = vsyncpa [#allocation6], 1

</llo_original>
